<compile_context>
chip_gen: v6e
topology: v6e:2x2x1
jax: 0.10.0
libtpu: 0.0.40
codegen_flags: <defaults>
</compile_context>

<pallas_src>
import math

import numpy as np
import jax
import jax.numpy as jnp
from jax.experimental import pallas as pl
from jax.experimental.pallas import tpu as pltpu


# ---------------------------------------------------------------------------
# Host-side: (out_size, in_size) bicubic interpolation matrix matching
# torch.nn.functional.interpolate(mode='bicubic', align_corners=False).
# ---------------------------------------------------------------------------
def _cubic_weight(x: float, a: float = -0.75) -> float:
    x = abs(x)
    if x <= 1.0:
        return (a + 2.0) * x * x * x - (a + 3.0) * x * x + 1.0
    elif x < 2.0:
        return a * x * x * x - 5.0 * a * x * x + 8.0 * a * x - 4.0 * a
    return 0.0


def build_bicubic_matrix(out_size: int, in_size: int) -> np.ndarray:
    mat = np.zeros((out_size, in_size), dtype=np.float32)
    scale = in_size / out_size
    for i in range(out_size):
        # half-pixel (align_corners=False) source coordinate
        src = (i + 0.5) * scale - 0.5
        fl = math.floor(src)
        t = src - fl
        taps = (fl - 1, fl, fl + 1, fl + 2)
        weights = (
            _cubic_weight(t + 1.0),
            _cubic_weight(t),
            _cubic_weight(1.0 - t),
            _cubic_weight(2.0 - t),
        )
        for idx, wgt in zip(taps, weights):
            idx_c = min(max(idx, 0), in_size - 1)  # border clamp (replicate)
            mat[i, idx_c] += wgt
    return mat


# ---------------------------------------------------------------------------
# Pallas kernel: one lane-dense MXU matmul per block of slabs.
#   X block: (B, H*W)   K^T: (H*W, S*S)   ->   Y block: (B, S*S)
# ---------------------------------------------------------------------------
def _scale_kron_kernel(kt_ref, x_ref, o_ref):
    o_ref[...] = jnp.dot(
        x_ref[...], kt_ref[...], preferred_element_type=jnp.float32
    ).astype(o_ref.dtype)


def _round_up(x: int, m: int) -> int:
    return ((x + m - 1) // m) * m


def _vmem_limit_bytes() -> int:
    """Per-generation scoped VMEM limit (~3/4 of physical VMEM)."""
    cap = 64 * 1024 * 1024  # conservative default (v7x per-TC VMEM)
    try:
        info = pltpu.get_tpu_info()
        cap = int(getattr(info, "vmem_capacity_bytes", cap))
    except Exception:
        pass
    # ~96 MiB on v5e/v6e (128 MiB physical), ~48 MiB on v7x (64 MiB physical).
    return (cap * 3) // 4


def _choose_batch_block(
    nc: int, hw: int, ss: int, x_bytes: int, k_bytes: int, vmem_limit: int
) -> int:
    """Pick the slab-block height B (rows of the X block / MXU M-dim)."""
    if nc <= 512:
        # One block covering the whole slab axis ("block dim == full array
        # dim" is always layout-legal, even for small / odd nc).
        return nc
    # Budget: leave headroom inside the scoped-VMEM limit and subtract K^T's
    # two pipeline buffers (Pallas double-buffers even constant-index blocks).
    k_foot = 2 * k_bytes * hw * ss
    budget = (vmem_limit * 3) // 4 - k_foot
    budget = max(budget, 4 * 1024 * 1024)
    # Double-buffered X row (hw elems) + Y row (ss elems) per slab.
    per_row = 2 * (x_bytes * hw + x_bytes * ss)
    max_b = max(128, (budget // per_row) // 128 * 128)
    # Never pad a single block far past the real slab width.
    max_b = min(max_b, _round_up(nc, 128))
    # Keep >= 2 grid steps so multi-TensorCore chips (v7x) can shard the
    # 'parallel' grid axis.
    half = _round_up(pl.cdiv(_round_up(nc, 128), 2), 128)
    max_b = min(max_b, max(half, 128))
    return int(max_b)


def scale_bicubic(x: jax.Array, size: int) -> jax.Array:
    """x: (N, C, H, W) -> (N, C, size, size), bicubic, align_corners=False."""
    n, c, h, w = x.shape
    nc, hw, ss = n * c, h * w, size * size

    wr = build_bicubic_matrix(size, h)            # (S, H)
    wc = build_bicubic_matrix(size, w)            # (S, W)
    k_t_np = np.ascontiguousarray(np.kron(wr, wc).T)   # (H*W, S*S)
    if x.dtype in (jnp.bfloat16, jnp.float16):
        k_dtype = x.dtype                          # full-rate MXU, f32 accum
    else:
        k_dtype = jnp.float32
    k_t = jnp.asarray(k_t_np, dtype=k_dtype)

    # Natural layout: (N, C, H, W) -> (N*C, H*W) is a free reshape.
    x2 = x.reshape(nc, hw)

    x_bytes = x.dtype.itemsize
    k_bytes = jnp.dtype(k_dtype).itemsize
    vmem_limit = _vmem_limit_bytes()
    blk_b = _choose_batch_block(nc, hw, ss, x_bytes, k_bytes, vmem_limit)
    n_blocks = pl.cdiv(nc, blk_b)   # ragged last block handled by Pallas

    cost = pl.CostEstimate(
        flops=2 * ss * hw * nc,
        transcendentals=0,
        bytes_accessed=x_bytes * nc * (hw + ss) + k_bytes * hw * ss,
    )

    out2 = pl.pallas_call(
        _scale_kron_kernel,
        out_shape=jax.ShapeDtypeStruct((nc, ss), x.dtype),
        grid_spec=pltpu.PrefetchScalarGridSpec(
            num_scalar_prefetch=0,
            grid=(n_blocks,),
            in_specs=[
                pl.BlockSpec((hw, ss), lambda i: (0, 0)),      # K^T (shared)
                pl.BlockSpec((blk_b, hw), lambda i: (i, 0)),   # X slab block
            ],
            out_specs=pl.BlockSpec((blk_b, ss), lambda i: (i, 0)),
        ),
        compiler_params=pltpu.CompilerParams(
            dimension_semantics=("parallel",),
            vmem_limit_bytes=int(vmem_limit),
        ),
        cost_estimate=cost,
    )(k_t, x2)

    # (N*C, S*S) -> (N, C, S, S): free reshape, no transpose.
    return out2.reshape(n, c, size, size)


# ---------------------------------------------------------------------------
# Pure-JAX reference (same separable formulation) for a sanity check.
# ---------------------------------------------------------------------------
def scale_bicubic_ref(x: jax.Array, size: int) -> jax.Array:
    n, c, h, w = x.shape
    wr = jnp.asarray(build_bicubic_matrix(size, h))
    wc = jnp.asarray(build_bicubic_matrix(size, w))
    return jnp.einsum(
        "sh,nchw,tw->ncst", wr, x, wc, precision=jax.lax.Precision.HIGHEST
    )


if __name__ == "__main__":
    key = jax.random.PRNGKey(0)
    N, C, H, W = 2, 4, 16, 16
    SIZE = 8  # Scale(size=8, mode='bicubic')

    x = jax.random.normal(key, (N, C, H, W), dtype=jnp.float32)

    out = jax.block_until_ready(scale_bicubic(x, SIZE))
    ref = jax.block_until_ready(scale_bicubic_ref(x, SIZE))

    assert out.shape == (N, C, SIZE, SIZE)
    np.testing.assert_allclose(np.asarray(out), np.asarray(ref), rtol=1e-4, atol=1e-4)

    print("KERNEL_OK")
</pallas_src>

<mosaic_0001>
module attributes {stable_mosaic.version = 11 : i64} {
  func.func @_scale_kron_kernel(%arg0: i32, %arg1: memref<256x64xf32, #tpu.memory_space<vmem>>, %arg2: memref<8x256xf32, #tpu.memory_space<vmem>>, %arg3: memref<8x64xf32, #tpu.memory_space<vmem>>) attributes {dimension_semantics = [#tpu.dimension_semantics<parallel>], iteration_bounds = array<i64: 1>, scalar_prefetch = 0 : i64, scratch_operands = 0 : i64, tpu.core_type = #tpu.core_type<tc>, window_params = [{pipeline_mode = #tpu.pipeline_mode<synchronous>, transform_indices = @transform_0, window_bounds = array<i64: 256, 64>}, {transform_indices = @transform_1, window_bounds = array<i64: 8, 256>}, {transform_indices = @transform_2, window_bounds = array<i64: 8, 64>}]} {
    %c0 = arith.constant 0 : index
    %c0_0 = arith.constant 0 : index
    %0 = vector.load %arg2[%c0, %c0_0] : memref<8x256xf32, #tpu.memory_space<vmem>>, vector<8x256xf32>
    %c0_1 = arith.constant 0 : index
    %c0_2 = arith.constant 0 : index
    %1 = vector.load %arg1[%c0_1, %c0_2] : memref<256x64xf32, #tpu.memory_space<vmem>>, vector<256x64xf32>
    %cst = arith.constant dense<0.000000e+00> : vector<8x64xf32>
    %2 = tpu.matmul %0, %1, %cst {dimension_numbers = #tpu.dot_dimension_numbers<[1], [0], [0], [1], [0, 0, 1, 1], [], []>} : vector<8x256xf32>, vector<256x64xf32>, vector<8x64xf32> -> vector<8x64xf32>
    %c0_3 = arith.constant 0 : index
    %c0_4 = arith.constant 0 : index
    %3 = vector.load %arg3[%c0_3, %c0_4] : memref<8x64xf32, #tpu.memory_space<vmem>>, vector<8x64xf32>
    tpu.vector_store %arg3[%c0_3, %c0_4], %2 {strides = array<i32>} : memref<8x64xf32, #tpu.memory_space<vmem>>, vector<8x64xf32>,
    return
  }
  func.func @transform_0(%arg0: i32) -> (i32, i32) {
    %c0_i32 = arith.constant 0 : i32
    %c0_i32_0 = arith.constant 0 : i32
    %c0_i32_1 = arith.constant 0 : i32
    return %c0_i32, %c0_i32_0 : i32, i32
  }
  func.func @transform_1(%arg0: i32) -> (i32, i32) {
    %c0_i32 = arith.constant 0 : i32
    %c0_i32_0 = arith.constant 0 : i32
    return %arg0, %c0_i32 : i32, i32
  }
  func.func @transform_2(%arg0: i32) -> (i32, i32) {
    %c0_i32 = arith.constant 0 : i32
    %c0_i32_0 = arith.constant 0 : i32
    return %arg0, %c0_i32 : i32, i32
  }
}

</mosaic_0001>

<llo_original>
// kernel: tpu_custom_call.1
$region0: #{tpu_custom_call.1}
  #allocation0 [shape = 'u32[]', space=smem, size = 0x4, offset = 0x4, fixed_abs, tag = 'smem constant byte address 0x4 - core index']
  #allocation1 [shape = 'u32[144,128]{1,0:T(1,128)}', space=vmem, size = 0x12000, scoped, tag = 'internal scratch']
  %s0 = inlined_call_operand.vmem [shape: f32[256,64], index: 0, kind: input, shape index: {}]
  %s1 = inlined_call_operand.vmem [shape: f32[8,256], index: 1, kind: input, shape index: {}]
  %s2 = inlined_call_operand.hbm [shape: f32[8,64], index: 2, kind: output, shape index: {}]
  %s3 = sld [smem:[#allocation0]]
  $region18: #{tpu_custom_call.1} parent=0
    _
  %s5 = ssub.s32 1, %s3
  %s6 = scalar_select 0, %s5, %s3
  $region1: #{tpu_custom_call.1} parent=0
    #allocation2 [shape = 'u8[4096]{0}', space=vmem, size = 0x1000, scoped, tag = 'output window, operand 0, single buffered']
    #allocation3 [shape = 's32[1]{0}', space=sflag, size = 0x4, scoped, tag = 'scoped memory for tpu_custom_call.1']
    %7 = vsyncpa [#allocation3], 0
    // Predicated region
    $region2: #{tpu_custom_call.1} parent=1 // pred_check
      _
    $region3: #{tpu_custom_call.1} parent=1 // pred_check_branch
      %9 = sbr.rel (0) target = $region5
    $region4: #{tpu_custom_call.1} parent=1 // pred_region
      _
    $region5: #{tpu_custom_call.1} parent=1 // pred_fallthru
      _
    // Predicated region
    $region6: #{tpu_custom_call.1} parent=1 // pred_check
      _
    $region7: #{tpu_custom_call.1} parent=1 // pred_check_branch
      %11 = sbr.rel (0) target = $region9
    $region8: #{tpu_custom_call.1} parent=1 // pred_region
      _
    $region9: #{tpu_custom_call.1} parent=1 // pred_fallthru
      _
    %v12 = vld [vmem:[%s1] sm:$0xff]
    %v13 = vld [vmem:[%s1 + $0x8] sm:$0xff]
    %v14 = vld [vmem:[%s0] sm:$0xff]
    %v15 = vld [vmem:[%s0 + $0x8] sm:$0xff]
    %v16 = vld [vmem:[%s0 + $0x10] sm:$0xff]
    %v17 = vld [vmem:[%s0 + $0x18] sm:$0xff]
    %v18 = vld [vmem:[%s0 + $0x20] sm:$0xff]
    %v19 = vld [vmem:[%s0 + $0x28] sm:$0xff]
    %v20 = vld [vmem:[%s0 + $0x30] sm:$0xff]
    %v21 = vld [vmem:[%s0 + $0x38] sm:$0xff]
    %v22 = vld [vmem:[%s0 + $0x40] sm:$0xff]
    %v23 = vld [vmem:[%s0 + $0x48] sm:$0xff]
    %v24 = vld [vmem:[%s0 + $0x50] sm:$0xff]
    %v25 = vld [vmem:[%s0 + $0x58] sm:$0xff]
    %v26 = vld [vmem:[%s0 + $0x60] sm:$0xff]
    %v27 = vld [vmem:[%s0 + $0x68] sm:$0xff]
    %v28 = vld [vmem:[%s0 + $0x70] sm:$0xff]
    %v29 = vld [vmem:[%s0 + $0x78] sm:$0xff]
    %v30 = vld [vmem:[%s0 + $0x80] sm:$0xff]
    %v31 = vld [vmem:[%s0 + $0x88] sm:$0xff]
    %v32 = vld [vmem:[%s0 + $0x90] sm:$0xff]
    %v33 = vld [vmem:[%s0 + $0x98] sm:$0xff]
    %v34 = vld [vmem:[%s0 + $0xa0] sm:$0xff]
    %v35 = vld [vmem:[%s0 + $0xa8] sm:$0xff]
    %v36 = vld [vmem:[%s0 + $0xb0] sm:$0xff]
    %v37 = vld [vmem:[%s0 + $0xb8] sm:$0xff]
    %v38 = vld [vmem:[%s0 + $0xc0] sm:$0xff]
    %v39 = vld [vmem:[%s0 + $0xc8] sm:$0xff]
    %v40 = vld [vmem:[%s0 + $0xd0] sm:$0xff]
    %v41 = vld [vmem:[%s0 + $0xd8] sm:$0xff]
    %v42 = vld [vmem:[%s0 + $0xe0] sm:$0xff]
    %v43 = vld [vmem:[%s0 + $0xe8] sm:$0xff]
    %v44 = vld [vmem:[%s0 + $0xf0] sm:$0xff]
    %v45 = vld [vmem:[%s0 + $0xf8] sm:$0xff]
    %46 = vmatprep.subr.mxu0 0.0
    %47 = vmatpush1.msra.mxu0 %v29
    %48 = vmatprep.subr.mxu0 0.0
    %49 = vmatpush1.msra.mxu0 %v28
    %50 = vmatprep.subr.mxu0 0.0
    %51 = vmatpush1.msra.mxu0 %v27
    %52 = vmatprep.subr.mxu0 0.0
    %53 = vmatpush1.msra.mxu0 %v26
    %54 = vmatprep.subr.mxu0 0.0
    %55 = vmatpush1.msra.mxu0 %v25
    %56 = vmatprep.subr.mxu0 0.0
    %57 = vmatpush1.msra.mxu0 %v24
    %58 = vmatprep.subr.mxu0 0.0
    %59 = vmatpush1.msra.mxu0 %v23
    %60 = vmatprep.subr.mxu0 0.0
    %61 = vmatpush1.msra.mxu0 %v22
    %62 = vmatprep.subr.mxu0 0.0
    %63 = vmatpush1.msra.mxu0 %v21
    %64 = vmatprep.subr.mxu0 0.0
    %65 = vmatpush1.msra.mxu0 %v20
    %66 = vmatprep.subr.mxu0 0.0
    %67 = vmatpush1.msra.mxu0 %v19
    %68 = vmatprep.subr.mxu0 0.0
    %69 = vmatpush1.msra.mxu0 %v18
    %70 = vmatprep.subr.mxu0 0.0
    %71 = vmatpush1.msra.mxu0 %v17
    %72 = vmatprep.subr.mxu0 0.0
    %73 = vmatpush1.msra.mxu0 %v16
    %74 = vmatprep.subr.mxu0 0.0
    %75 = vmatpush1.msra.mxu0 %v15
    %76 = vmatprep.subr.mxu0 0.0
    %77 = vmatpush1.msra.mxu0 %v14
    %78 = vmatprep.subr.mxu0 0.0
    %79 = vmatpush2.msra.mxu0 %v45
    %80 = vmatprep.subr.mxu0 0.0
    %81 = vmatpush2.msra.mxu0 %v44
    %82 = vmatprep.subr.mxu0 0.0
    %83 = vmatpush2.msra.mxu0 %v43
    %84 = vmatprep.subr.mxu0 0.0
    %85 = vmatpush2.msra.mxu0 %v42
    %86 = vmatprep.subr.mxu0 0.0
    %87 = vmatpush2.msra.mxu0 %v41
    %88 = vmatprep.subr.mxu0 0.0
    %89 = vmatpush2.msra.mxu0 %v40
    %90 = vmatprep.subr.mxu0 0.0
    %91 = vmatpush2.msra.mxu0 %v39
    %92 = vmatprep.subr.mxu0 0.0
    %93 = vmatpush2.msra.mxu0 %v38
    %94 = vmatprep.subr.mxu0 0.0
    %95 = vmatpush2.msra.mxu0 %v37
    %96 = vmatprep.subr.mxu0 0.0
    %97 = vmatpush2.msra.mxu0 %v36
    %98 = vmatprep.subr.mxu0 0.0
    %99 = vmatpush2.msra.mxu0 %v35
    %100 = vmatprep.subr.mxu0 0.0
    %101 = vmatpush2.msra.mxu0 %v34
    %102 = vmatprep.subr.mxu0 0.0
    %103 = vmatpush2.msra.mxu0 %v33
    %104 = vmatprep.subr.mxu0 0.0
    %105 = vmatpush2.msra.mxu0 %v32
    %106 = vmatprep.subr.mxu0 0.0
    %107 = vmatpush2.msra.mxu0 %v31
    %108 = vmatprep.subr.mxu0 0.0
    %109 = vmatpush2.msra.mxu0 %v30
    %110 = vmatprep.mubr.f32.mxu0 %v13
    %111 = vmatmul.mubr.f32.gmra.mxu0 %v12
    %v112 = vpop.f32.mrf.mxu0
    %v113 = vadd.f32 0.0, %v112
    %v114 = vpop.f32.mrf.mxu0
    %115 = vdwg.mxu0
    %vm116 = vcmask 523264
    %117 = vst.msk [vmem:[#allocation2] sm:$0xff] %vm116, %v113
    // Predicated region
    $region10: #{tpu_custom_call.1} parent=1 // pred_check
      _
    $region11: #{tpu_custom_call.1} parent=1 // pred_check_branch
      %119 = sbr.rel (0) target = $region13
    $region12: #{tpu_custom_call.1} parent=1 // pred_region
      %s121 = ssub.s32 128, 128
      %122 = vsyncadd [#allocation3], %s121
      %s124 = sshll.u32 [#allocation2], 4
      %s125 = int_to_ptr.vmem [resolvable:$true] %s124
      %127 = dma.vmem_to_hbm [thread:$0]  %s125, 128, %s2, [#allocation3]
    $region13: #{tpu_custom_call.1} parent=1 // pred_fallthru
      _
    // Predicated region
    $region14: #{tpu_custom_call.1} parent=1 // pred_check
      _
    $region15: #{tpu_custom_call.1} parent=1 // pred_check_branch
      %129 = sbr.rel (0) target = $region17
    $region16: #{tpu_custom_call.1} parent=1 // pred_region
      %130 = dma.done [#allocation3], 128
    $region17: #{tpu_custom_call.1} parent=1 // pred_fallthru
      _
    %131 = vsyncpa [#allocation3], 1

</llo_original>
